<compile_context>
chip_gen: v5e
topology: v5e:2x2
jax: 0.10.0
libtpu: 0.0.40
codegen_flags: <defaults>
</compile_context>

<pallas_src>
import jax
import jax.numpy as jnp
from jax.experimental import pallas as pl
from jax.experimental.pallas import tpu as pltpu

LANE = 128            # batch padded to a multiple of the lane width
MAX_TILE_COLS = 2048  # max batch columns per grid step (working set ~90 KiB)

# Offsets into the packed SMEM parameter vector (24 x f32, last entry padding).
_W1, _B1 = 0, 9      # w1: (3,3) row-major, b1: (3,)
_W2, _B2 = 12, 18    # w2: (2,3) row-major, b2: (2,)
_W3, _B3 = 20, 22    # w3: (1,2) row-major, b3: (1,)


def _mlp_kernel(x_ref, p_ref, out_ref):
    """One batch tile of the 3->3->2->1 chain, batch on lanes.

    x_ref   : (3, TB)  VMEM  -- input features x batch (transposed, zero-padded)
    p_ref   : (24,)    SMEM  -- all weights/biases as scalars
    out_ref : (8, TB)  VMEM  -- rows 0..2 = t1, 3..4 = t2, 5 = t3, 6..7 = 0
    """
    x = x_ref[...]                              # (3, TB) f32
    x0, x1, x2 = x[0:1, :], x[1:2, :], x[2:3, :]

    # Layer1 (Linear(3,3)): t1[j] = sum_k x[k]*w1[j,k] + b1[j]  -- VPU fma chain,
    # weight scalars broadcast from SMEM across all 128 lanes.
    def layer1(j):
        return (x0 * p_ref[_W1 + 3 * j + 0]
                + x1 * p_ref[_W1 + 3 * j + 1]
                + x2 * p_ref[_W1 + 3 * j + 2]
                + p_ref[_B1 + j])

    t1_0, t1_1, t1_2 = layer1(0), layer1(1), layer1(2)

    # Layer2 (Linear(3,2))
    def layer2(j):
        return (t1_0 * p_ref[_W2 + 3 * j + 0]
                + t1_1 * p_ref[_W2 + 3 * j + 1]
                + t1_2 * p_ref[_W2 + 3 * j + 2]
                + p_ref[_B2 + j])

    t2_0, t2_1 = layer2(0), layer2(1)

    # Layer3 (Linear(2,1))
    t3_0 = t2_0 * p_ref[_W3 + 0] + t2_1 * p_ref[_W3 + 1] + p_ref[_B3]

    # Single lane-dense, sublane-aligned (8, TB) store.
    pad = jnp.zeros_like(x[0:2, :])
    out_ref[...] = jnp.concatenate(
        [t1_0, t1_1, t1_2, t2_0, t2_1, t3_0, pad], axis=0)


def init_params():
    """Deterministic parameter init (PRNGKey(0) + the module's literal weights)."""
    key = jax.random.PRNGKey(0)
    k_b1, k_w2, k_b2, k_w3, k_b3 = jax.random.split(key, 5)

    # Layer1: Linear(3, 3); weight taken from the module's `weights` row [1,2,3]
    # tiled to the declared (3, 3) shape (see header note).
    given = jnp.asarray([[1.0, 2.0, 3.0], [1.0, 2.0, 3.0]], jnp.float32)
    w1 = jnp.tile(given[:1], (3, 1))                                 # (3, 3)
    b1 = jax.random.normal(k_b1, (3,), jnp.float32) * 0.1
    w2 = jax.random.normal(k_w2, (2, 3), jnp.float32) * 0.5          # (2, 3)
    b2 = jax.random.normal(k_b2, (2,), jnp.float32) * 0.1
    w3 = jax.random.normal(k_w3, (1, 2), jnp.float32) * 0.5          # (1, 2)
    b3 = jax.random.normal(k_b3, (1,), jnp.float32) * 0.1
    return dict(w1=w1, b1=b1, w2=w2, b2=b2, w3=w3, b3=b3)


def pack_params(p):
    """Flatten all weights/biases into the 24-scalar SMEM vector (do ONCE)."""
    flat = jnp.concatenate([
        jnp.asarray(p["w1"], jnp.float32).reshape(-1),   # 9
        jnp.asarray(p["b1"], jnp.float32).reshape(-1),   # 3
        jnp.asarray(p["w2"], jnp.float32).reshape(-1),   # 6
        jnp.asarray(p["b2"], jnp.float32).reshape(-1),   # 2
        jnp.asarray(p["w3"], jnp.float32).reshape(-1),   # 2
        jnp.asarray(p["b3"], jnp.float32).reshape(-1),   # 1
        jnp.zeros((1,), jnp.float32),                    # pad -> 24
    ])
    return flat


@jax.jit
def neuronet_forward(x, packed_params):
    """Returns (tensor1, tensor2, tensor3) like NeuroNet.forward."""
    n, f = x.shape
    assert f == 3, "NeuroNet expects 3 input features"

    # Pad batch to a lane multiple; single grid step for small batches,
    # 2048-wide tiles for large ones.
    b_pad = ((n + LANE - 1) // LANE) * LANE
    if b_pad <= MAX_TILE_COLS:
        tb = b_pad
    else:
        tb = MAX_TILE_COLS
        b_pad = ((b_pad + tb - 1) // tb) * tb
    nb = b_pad // tb

    # Layout plumbing: features on sublanes, batch on lanes (zero-padded cols).
    xt = jnp.zeros((3, b_pad), jnp.float32).at[:, :n].set(
        jnp.asarray(x, jnp.float32).T)

    # NOTE(v7x): for very large batches the batch axis could be marked
    # CORE_PARALLEL to shard across the two TensorCores; plain "parallel" is
    # kept here since it is harmless on 1-TC chips and the kernel is
    # overhead-bound at these sizes anyway.
    out = pl.pallas_call(
        _mlp_kernel,
        grid=(nb,),
        in_specs=[
            pl.BlockSpec((3, tb), lambda i: (0, i)),                    # x tile
            pl.BlockSpec(memory_space=pltpu.MemorySpace.SMEM),          # params
        ],
        out_specs=pl.BlockSpec((8, tb), lambda i: (0, i)),
        out_shape=jax.ShapeDtypeStruct((8, b_pad), jnp.float32),
        compiler_params=pltpu.CompilerParams(
            dimension_semantics=("arbitrary",) if nb == 1 else ("parallel",)),
    )(xt, packed_params)

    tensor1 = out[0:3, :n].T     # (n, 3)
    tensor2 = out[3:5, :n].T     # (n, 2)
    tensor3 = out[5:6, :n].T     # (n, 1)
    return tensor1, tensor2, tensor3


def _reference_forward(x, p):
    # Pure-VPU f32 reference (explicit broadcast-multiply-sum; avoids any
    # reduced-precision matmul path so the comparison is apples-to-apples).
    x = jnp.asarray(x, jnp.float32)
    t1 = jnp.sum(x[:, None, :] * p["w1"][None, :, :], axis=-1) + p["b1"]
    t2 = jnp.sum(t1[:, None, :] * p["w2"][None, :, :], axis=-1) + p["b2"]
    t3 = jnp.sum(t2[:, None, :] * p["w3"][None, :, :], axis=-1) + p["b3"]
    return t1, t2, t3


if __name__ == "__main__":
    params = init_params()
    packed = pack_params(params)   # hoisted out of the forward pass

    # Small batch (single grid step, full-array blocks).
    x_small = jax.random.normal(jax.random.PRNGKey(0), (4, 3), jnp.float32)
    outs = jax.block_until_ready(neuronet_forward(x_small, packed))
    refs = _reference_forward(x_small, params)
    for o, r in zip(outs, refs):
        assert o.shape == r.shape and o.dtype == r.dtype
        assert jnp.allclose(o, r, atol=1e-4, rtol=1e-5)

    # Larger batch exercising the multi-tile (grid > 1) path.
    x_big = jax.random.normal(jax.random.PRNGKey(1), (2600, 3), jnp.float32)
    outs_b = jax.block_until_ready(neuronet_forward(x_big, packed))
    refs_b = _reference_forward(x_big, params)
    for o, r in zip(outs_b, refs_b):
        assert o.shape == r.shape and o.dtype == r.dtype
        assert jnp.allclose(o, r, atol=1e-4, rtol=1e-5)

    print("KERNEL_OK")
</pallas_src>

<mosaic_0001>
module attributes {stable_mosaic.version = 11 : i64} {
  func.func @_mlp_kernel(%arg0: i32, %arg1: memref<3x128xf32, #tpu.memory_space<vmem>>, %arg2: memref<24xf32, #tpu.memory_space<smem>>, %arg3: memref<8x128xf32, #tpu.memory_space<vmem>>) attributes {dimension_semantics = [#tpu.dimension_semantics<arbitrary>], iteration_bounds = array<i64: 1>, scalar_prefetch = 0 : i64, scratch_operands = 0 : i64, tpu.core_type = #tpu.core_type<tc>, window_params = [{transform_indices = @transform_0, window_bounds = array<i64: 3, 128>}, {transform_indices = @transform_1, window_bounds = array<i64: 24>}, {transform_indices = @transform_2, window_bounds = array<i64: 8, 128>}]} {
    %c0 = arith.constant 0 : index
    %c0_0 = arith.constant 0 : index
    %0 = vector.load %arg1[%c0, %c0_0] : memref<3x128xf32, #tpu.memory_space<vmem>>, vector<3x128xf32>
    %1 = vector.extract_strided_slice %0 {offsets = [0, 0], sizes = [1, 128], strides = [1, 1]} : vector<3x128xf32> to vector<1x128xf32>
    %2 = vector.extract_strided_slice %0 {offsets = [1, 0], sizes = [1, 128], strides = [1, 1]} : vector<3x128xf32> to vector<1x128xf32>
    %3 = vector.extract_strided_slice %0 {offsets = [2, 0], sizes = [1, 128], strides = [1, 1]} : vector<3x128xf32> to vector<1x128xf32>
    %c0_1 = arith.constant 0 : index
    %4 = memref.load %arg2[%c0_1] : memref<24xf32, #tpu.memory_space<smem>>
    %5 = vector.broadcast %4 : f32 to vector<1x128xf32>
    %6 = arith.mulf %1, %5 : vector<1x128xf32>
    %c1 = arith.constant 1 : index
    %7 = memref.load %arg2[%c1] : memref<24xf32, #tpu.memory_space<smem>>
    %8 = vector.broadcast %7 : f32 to vector<1x128xf32>
    %9 = arith.mulf %2, %8 : vector<1x128xf32>
    %10 = arith.addf %6, %9 : vector<1x128xf32>
    %c2 = arith.constant 2 : index
    %11 = memref.load %arg2[%c2] : memref<24xf32, #tpu.memory_space<smem>>
    %12 = vector.broadcast %11 : f32 to vector<1x128xf32>
    %13 = arith.mulf %3, %12 : vector<1x128xf32>
    %14 = arith.addf %10, %13 : vector<1x128xf32>
    %c9 = arith.constant 9 : index
    %15 = memref.load %arg2[%c9] : memref<24xf32, #tpu.memory_space<smem>>
    %16 = vector.broadcast %15 : f32 to vector<1x128xf32>
    %17 = arith.addf %14, %16 : vector<1x128xf32>
    %c3 = arith.constant 3 : index
    %18 = memref.load %arg2[%c3] : memref<24xf32, #tpu.memory_space<smem>>
    %19 = vector.broadcast %18 : f32 to vector<1x128xf32>
    %20 = arith.mulf %1, %19 : vector<1x128xf32>
    %c4 = arith.constant 4 : index
    %21 = memref.load %arg2[%c4] : memref<24xf32, #tpu.memory_space<smem>>
    %22 = vector.broadcast %21 : f32 to vector<1x128xf32>
    %23 = arith.mulf %2, %22 : vector<1x128xf32>
    %24 = arith.addf %20, %23 : vector<1x128xf32>
    %c5 = arith.constant 5 : index
    %25 = memref.load %arg2[%c5] : memref<24xf32, #tpu.memory_space<smem>>
    %26 = vector.broadcast %25 : f32 to vector<1x128xf32>
    %27 = arith.mulf %3, %26 : vector<1x128xf32>
    %28 = arith.addf %24, %27 : vector<1x128xf32>
    %c10 = arith.constant 10 : index
    %29 = memref.load %arg2[%c10] : memref<24xf32, #tpu.memory_space<smem>>
    %30 = vector.broadcast %29 : f32 to vector<1x128xf32>
    %31 = arith.addf %28, %30 : vector<1x128xf32>
    %c6 = arith.constant 6 : index
    %32 = memref.load %arg2[%c6] : memref<24xf32, #tpu.memory_space<smem>>
    %33 = vector.broadcast %32 : f32 to vector<1x128xf32>
    %34 = arith.mulf %1, %33 : vector<1x128xf32>
    %c7 = arith.constant 7 : index
    %35 = memref.load %arg2[%c7] : memref<24xf32, #tpu.memory_space<smem>>
    %36 = vector.broadcast %35 : f32 to vector<1x128xf32>
    %37 = arith.mulf %2, %36 : vector<1x128xf32>
    %38 = arith.addf %34, %37 : vector<1x128xf32>
    %c8 = arith.constant 8 : index
    %39 = memref.load %arg2[%c8] : memref<24xf32, #tpu.memory_space<smem>>
    %40 = vector.broadcast %39 : f32 to vector<1x128xf32>
    %41 = arith.mulf %3, %40 : vector<1x128xf32>
    %42 = arith.addf %38, %41 : vector<1x128xf32>
    %c11 = arith.constant 11 : index
    %43 = memref.load %arg2[%c11] : memref<24xf32, #tpu.memory_space<smem>>
    %44 = vector.broadcast %43 : f32 to vector<1x128xf32>
    %45 = arith.addf %42, %44 : vector<1x128xf32>
    %c12 = arith.constant 12 : index
    %46 = memref.load %arg2[%c12] : memref<24xf32, #tpu.memory_space<smem>>
    %47 = vector.broadcast %46 : f32 to vector<1x128xf32>
    %48 = arith.mulf %17, %47 : vector<1x128xf32>
    %c13 = arith.constant 13 : index
    %49 = memref.load %arg2[%c13] : memref<24xf32, #tpu.memory_space<smem>>
    %50 = vector.broadcast %49 : f32 to vector<1x128xf32>
    %51 = arith.mulf %31, %50 : vector<1x128xf32>
    %52 = arith.addf %48, %51 : vector<1x128xf32>
    %c14 = arith.constant 14 : index
    %53 = memref.load %arg2[%c14] : memref<24xf32, #tpu.memory_space<smem>>
    %54 = vector.broadcast %53 : f32 to vector<1x128xf32>
    %55 = arith.mulf %45, %54 : vector<1x128xf32>
    %56 = arith.addf %52, %55 : vector<1x128xf32>
    %c18 = arith.constant 18 : index
    %57 = memref.load %arg2[%c18] : memref<24xf32, #tpu.memory_space<smem>>
    %58 = vector.broadcast %57 : f32 to vector<1x128xf32>
    %59 = arith.addf %56, %58 : vector<1x128xf32>
    %c15 = arith.constant 15 : index
    %60 = memref.load %arg2[%c15] : memref<24xf32, #tpu.memory_space<smem>>
    %61 = vector.broadcast %60 : f32 to vector<1x128xf32>
    %62 = arith.mulf %17, %61 : vector<1x128xf32>
    %c16 = arith.constant 16 : index
    %63 = memref.load %arg2[%c16] : memref<24xf32, #tpu.memory_space<smem>>
    %64 = vector.broadcast %63 : f32 to vector<1x128xf32>
    %65 = arith.mulf %31, %64 : vector<1x128xf32>
    %66 = arith.addf %62, %65 : vector<1x128xf32>
    %c17 = arith.constant 17 : index
    %67 = memref.load %arg2[%c17] : memref<24xf32, #tpu.memory_space<smem>>
    %68 = vector.broadcast %67 : f32 to vector<1x128xf32>
    %69 = arith.mulf %45, %68 : vector<1x128xf32>
    %70 = arith.addf %66, %69 : vector<1x128xf32>
    %c19 = arith.constant 19 : index
    %71 = memref.load %arg2[%c19] : memref<24xf32, #tpu.memory_space<smem>>
    %72 = vector.broadcast %71 : f32 to vector<1x128xf32>
    %73 = arith.addf %70, %72 : vector<1x128xf32>
    %c20 = arith.constant 20 : index
    %74 = memref.load %arg2[%c20] : memref<24xf32, #tpu.memory_space<smem>>
    %75 = vector.broadcast %74 : f32 to vector<1x128xf32>
    %76 = arith.mulf %59, %75 : vector<1x128xf32>
    %c21 = arith.constant 21 : index
    %77 = memref.load %arg2[%c21] : memref<24xf32, #tpu.memory_space<smem>>
    %78 = vector.broadcast %77 : f32 to vector<1x128xf32>
    %79 = arith.mulf %73, %78 : vector<1x128xf32>
    %80 = arith.addf %76, %79 : vector<1x128xf32>
    %c22 = arith.constant 22 : index
    %81 = memref.load %arg2[%c22] : memref<24xf32, #tpu.memory_space<smem>>
    %82 = vector.broadcast %81 : f32 to vector<1x128xf32>
    %83 = arith.addf %80, %82 : vector<1x128xf32>
    %cst = arith.constant 0.000000e+00 : f32
    %84 = vector.broadcast %cst : f32 to vector<2x128xf32>
    %85 = tpu.concatenate %17, %31, %45, %59, %73, %83, %84 in 0 : vector<1x128xf32>, vector<1x128xf32>, vector<1x128xf32>, vector<1x128xf32>, vector<1x128xf32>, vector<1x128xf32>, vector<2x128xf32> -> vector<8x128xf32>
    %c0_2 = arith.constant 0 : index
    %c0_3 = arith.constant 0 : index
    %86 = vector.load %arg3[%c0_2, %c0_3] : memref<8x128xf32, #tpu.memory_space<vmem>>, vector<8x128xf32>
    tpu.vector_store %arg3[%c0_2, %c0_3], %85 {strides = array<i32>} : memref<8x128xf32, #tpu.memory_space<vmem>>, vector<8x128xf32>,
    return
  }
  func.func @transform_0(%arg0: i32) -> (i32, i32) {
    %c0_i32 = arith.constant 0 : i32
    %c0_i32_0 = arith.constant 0 : i32
    return %c0_i32, %arg0 : i32, i32
  }
  func.func @transform_1(%arg0: i32) -> i32 {
    %c0_i32 = arith.constant 0 : i32
    %c0_i32_0 = arith.constant 0 : i32
    return %c0_i32 : i32
  }
  func.func @transform_2(%arg0: i32) -> (i32, i32) {
    %c0_i32 = arith.constant 0 : i32
    %c0_i32_0 = arith.constant 0 : i32
    return %c0_i32, %arg0 : i32, i32
  }
}

</mosaic_0001>

<llo_original>
// kernel: neuronet_forward.1
$region0: #{neuronet_forward.1}
  #allocation0 [shape = 'u32[]', space=smem, size = 0x4, offset = 0x4, fixed_abs, tag = 'smem constant byte address 0x4 - core index']
  #allocation1 [shape = 'u32[72,128]{1,0:T(1,128)}', space=vmem, size = 0x9000, scoped, tag = 'internal scratch']
  %s0 = inlined_call_operand.vmem [shape: f32[3,128], index: 0, kind: input, shape index: {}]
  %s1 = inlined_call_operand.vmem [shape: f32[24], index: 1, kind: input, shape index: {}]
  %s2 = inlined_call_operand.vmem [shape: f32[8,128], index: 2, kind: output, shape index: {}]
  %s3 = sld [smem:[#allocation0]]
  $region22: #{neuronet_forward.1} parent=0
    _
  %s5 = ssub.s32 1, %s3
  %s6 = scalar_select 0, %s5, %s3
  $region1: #{neuronet_forward.1} parent=0
    #allocation2 [shape = 'u8[512]{0}', space=smem, size = 0x200, scoped, tag = 'input window, operand 1, single buffered']
    #allocation3 [shape = 's32[1]{0}', space=sflag, size = 0x4, scoped, tag = 'scoped memory for neuronet_forward.1']
    %7 = vsyncpa [#allocation3], 0
    // Predicated region
    $region2: #{neuronet_forward.1} parent=1 // pred_check
      _
    $region3: #{neuronet_forward.1} parent=1 // pred_check_branch
      %9 = sbr.rel (0) target = $region5
    $region4: #{neuronet_forward.1} parent=1 // pred_region
      _
    $region5: #{neuronet_forward.1} parent=1 // pred_fallthru
      _
    // Predicated region
    $region6: #{neuronet_forward.1} parent=1 // pred_check
      _
    $region7: #{neuronet_forward.1} parent=1 // pred_check_branch
      %11 = sbr.rel (0) target = $region9
    $region8: #{neuronet_forward.1} parent=1 // pred_region
      %13 = vsyncadd [#allocation3], 0
      %s15 = sshll.u32 %s1, 4
      %s16 = int_to_ptr.vmem [resolvable:$true] %s15
      %18 = dma.vmem_to_smem %s16, 16, [#allocation2], [#allocation3]
    $region9: #{neuronet_forward.1} parent=1 // pred_fallthru
      _
    // Predicated region
    $region10: #{neuronet_forward.1} parent=1 // pred_check
      _
    $region11: #{neuronet_forward.1} parent=1 // pred_check_branch
      %20 = sbr.rel (0) target = $region13
    $region12: #{neuronet_forward.1} parent=1 // pred_region
      %22 = dma.done [#allocation3], 16
    $region13: #{neuronet_forward.1} parent=1 // pred_fallthru
      _
    %23 = sfence
    %v24 = vld [vmem:[%s0] sm:$0x7]
    %s25 = sld [smem:[#allocation2]]
    %v26 = vstv %s25
    %v27 = vmul.f32 %v24, %v26
    %s28 = sld [smem:[#allocation2 + $0x1]]
    %v29 = vstv %s28
    %v30 = vmul.f32 %v24, %v29
    %v32 = vrot.slane %v30, 1
    %v34 = vadd.f32 %v27, %v32
    %s35 = sld [smem:[#allocation2 + $0x2]]
    %v36 = vstv %s35
    %v37 = vmul.f32 %v24, %v36
    %v39 = vrot.slane %v37, 2
    %v41 = vadd.f32 %v34, %v39
    %s42 = sld [smem:[#allocation2 + $0x9]]
    %v43 = vstv %s42
    %v44 = vadd.f32 %v41, %v43
    %s45 = sld [smem:[#allocation2 + $0x3]]
    %v46 = vstv %s45
    %v47 = vmul.f32 %v24, %v46
    %s48 = sld [smem:[#allocation2 + $0x4]]
    %v49 = vstv %s48
    %v50 = vmul.f32 %v24, %v49
    %v52 = vrot.slane %v50, 1
    %v54 = vadd.f32 %v47, %v52
    %s55 = sld [smem:[#allocation2 + $0x5]]
    %v56 = vstv %s55
    %v57 = vmul.f32 %v24, %v56
    %v59 = vrot.slane %v57, 2
    %v61 = vadd.f32 %v54, %v59
    %s62 = sld [smem:[#allocation2 + $0xa]]
    %v63 = vstv %s62
    %v64 = vadd.f32 %v61, %v63
    %s65 = sld [smem:[#allocation2 + $0x6]]
    %v66 = vstv %s65
    %v67 = vmul.f32 %v24, %v66
    %s68 = sld [smem:[#allocation2 + $0x7]]
    %v69 = vstv %s68
    %v70 = vmul.f32 %v24, %v69
    %v72 = vrot.slane %v70, 1
    %v74 = vadd.f32 %v67, %v72
    %s75 = sld [smem:[#allocation2 + $0x8]]
    %v76 = vstv %s75
    %v77 = vmul.f32 %v24, %v76
    %v79 = vrot.slane %v77, 2
    %v81 = vadd.f32 %v74, %v79
    %s82 = sld [smem:[#allocation2 + $0xb]]
    %v83 = vstv %s82
    %v84 = vadd.f32 %v81, %v83
    %s85 = sld [smem:[#allocation2 + $0xc]]
    %v86 = vstv %s85
    %v87 = vmul.f32 %v44, %v86
    %s88 = sld [smem:[#allocation2 + $0xd]]
    %v89 = vstv %s88
    %v90 = vmul.f32 %v64, %v89
    %v91 = vadd.f32 %v87, %v90
    %s92 = sld [smem:[#allocation2 + $0xe]]
    %v93 = vstv %s92
    %v94 = vmul.f32 %v84, %v93
    %v95 = vadd.f32 %v91, %v94
    %s96 = sld [smem:[#allocation2 + $0x12]]
    %v97 = vstv %s96
    %v98 = vadd.f32 %v95, %v97
    %s99 = sld [smem:[#allocation2 + $0xf]]
    %v100 = vstv %s99
    %v101 = vmul.f32 %v44, %v100
    %s102 = sld [smem:[#allocation2 + $0x10]]
    %v103 = vstv %s102
    %v104 = vmul.f32 %v64, %v103
    %v105 = vadd.f32 %v101, %v104
    %s106 = sld [smem:[#allocation2 + $0x11]]
    %v107 = vstv %s106
    %v108 = vmul.f32 %v84, %v107
    %v109 = vadd.f32 %v105, %v108
    %s110 = sld [smem:[#allocation2 + $0x13]]
    %v111 = vstv %s110
    %v112 = vadd.f32 %v109, %v111
    %s113 = sld [smem:[#allocation2 + $0x14]]
    %v114 = vstv %s113
    %v115 = vmul.f32 %v98, %v114
    %s116 = sld [smem:[#allocation2 + $0x15]]
    %v117 = vstv %s116
    %v118 = vmul.f32 %v112, %v117
    %v119 = vadd.f32 %v115, %v118
    %s120 = sld [smem:[#allocation2 + $0x16]]
    %v121 = vstv %s120
    %v122 = vadd.f32 %v119, %v121
    %v124 = vrot.slane %v64, 7
    %v127 = vrot.slane %v84, 6
    %v130 = vrot.slane %v98, 5
    %v133 = vrot.slane %v112, 4
    %v136 = vrot.slane %v122, 3
    %vm138 = vcmask 1040384
    %v139 = vsel %vm138, %v44, %v124
    %vm140 = vcmask 1041408
    %v141 = vsel %vm140, %v139, %v127
    %vm142 = vcmask 1042432
    %v143 = vsel %vm142, %v141, %v130
    %vm144 = vcmask 1043456
    %v145 = vsel %vm144, %v143, %v133
    %vm146 = vcmask 1044480
    %v147 = vsel %vm146, %v145, %v136
    %vm148 = vcmask 1045504
    %v149 = vsel %vm148, %v147, 0.0
    %150 = vst [vmem:[%s2] sm:$0xff] %v149
    // Predicated region
    $region14: #{neuronet_forward.1} parent=1 // pred_check
      _
    $region15: #{neuronet_forward.1} parent=1 // pred_check_branch
      %152 = sbr.rel (0) target = $region17
    $region16: #{neuronet_forward.1} parent=1 // pred_region
      _
    $region17: #{neuronet_forward.1} parent=1 // pred_fallthru
      _
    // Predicated region
    $region18: #{neuronet_forward.1} parent=1 // pred_check
      _
    $region19: #{neuronet_forward.1} parent=1 // pred_check_branch
      %154 = sbr.rel (0) target = $region21
    $region20: #{neuronet_forward.1} parent=1 // pred_region
      _
    $region21: #{neuronet_forward.1} parent=1 // pred_fallthru
      _
    %155 = vsyncpa [#allocation3], 1

</llo_original>
